<compile_context>
chip_gen: v7x
topology: tpu7x:2x2x1
jax: 0.10.0
libtpu: 0.0.40
codegen_flags: <defaults>
</compile_context>

<pallas_src>
import math

import jax
import jax.numpy as jnp
from jax.experimental import pallas as pl
from jax.experimental.pallas import tpu as pltpu


def _layerscale_kernel(x_ref, gamma_ref, o_ref):
    # x_ref: (tile_rows, tile_dim); gamma_ref: (1, tile_dim) broadcasts over rows.
    o_ref[...] = x_ref[...] * gamma_ref[...]


def _sublane_for_dtype(dtype):
    itemsize = jnp.dtype(dtype).itemsize
    return {4: 8, 2: 16, 1: 32}.get(itemsize, 8)


def _tpu_budgets():
    """(target_block_bytes, vmem_limit_bytes, min_row_steps) per TPU generation."""
    try:
        info = pltpu.get_tpu_info()
        vmem = getattr(info, "vmem_capacity_bytes", None)
    except Exception:
        vmem = None
    if vmem is None:
        # Unknown hardware (e.g. interpret mode): conservative defaults.
        return 2 << 20, None, 1
    if vmem <= (96 << 20):
        # v7x-class: 64 MiB VMEM per TensorCore, 2 TCs/chip -> moderate tiles,
        # explicit (but bounded) vmem limit, >=4 parallel grid steps.
        return 3 << 20, 40 << 20, 4
    # v5e / v6e: 128 MiB physical VMEM, single TensorCore.
    return 4 << 20, 48 << 20, 1


def _pick_tile_rows(rows, row_bytes, *, sublane, target_block_bytes, min_steps=1):
    """Largest sublane-aligned row tile whose block stays <= target_block_bytes."""
    tr = (target_block_bytes // max(row_bytes, 1)) // sublane * sublane
    tr = max(sublane, tr)
    rows_up = ((rows + sublane - 1) // sublane) * sublane
    tr = min(tr, max(sublane, rows_up))
    if min_steps > 1:
        # Keep at least `min_steps` row tiles so both v7x cores get work.
        cap = max(sublane, (rows // min_steps) // sublane * sublane)
        tr = min(tr, cap)
    return tr


def _run(x2d, gamma_row, tile_rows, tile_dim, *, vmem_limit_bytes):
    rows, width = x2d.shape
    dtype = x2d.dtype
    itemsize = jnp.dtype(dtype).itemsize
    nj = -(-width // tile_dim)   # dim tiles (outer / slow axis -> gamma stays resident)
    ni = -(-rows // tile_rows)   # row tiles (Pallas masks the ragged last block)
    cost = pl.CostEstimate(
        flops=rows * width,
        transcendentals=0,
        bytes_accessed=2 * rows * width * itemsize + width * itemsize,
    )
    cp_kwargs = dict(dimension_semantics=("parallel", "parallel"))
    if vmem_limit_bytes is not None:
        cp_kwargs["vmem_limit_bytes"] = vmem_limit_bytes
    return pl.pallas_call(
        _layerscale_kernel,
        out_shape=jax.ShapeDtypeStruct((rows, width), dtype),
        grid=(nj, ni),
        in_specs=[
            pl.BlockSpec((tile_rows, tile_dim), lambda j, i: (i, j)),
            pl.BlockSpec((1, tile_dim), lambda j, i: (0, j)),
        ],
        out_specs=pl.BlockSpec((tile_rows, tile_dim), lambda j, i: (i, j)),
        compiler_params=pltpu.CompilerParams(**cp_kwargs),
        cost_estimate=cost,
    )(x2d, gamma_row)


def layer_scale(x, gamma, *, max_lane_width=8192):
    """Apply LayerScale: out = x * gamma, gamma shape (dim,), broadcast on last axis."""
    orig_shape = x.shape
    dim = int(orig_shape[-1])
    assert gamma.shape == (dim,)
    dtype = x.dtype
    itemsize = jnp.dtype(dtype).itemsize
    sublane = _sublane_for_dtype(dtype)
    target_block_bytes, vmem_limit_bytes, min_steps = _tpu_budgets()

    rows = 1
    for s in orig_shape[:-1]:
        rows *= int(s)
    total = rows * dim
    gamma = gamma.astype(dtype)

    # --- Lane-aligned path: dim is a multiple of 128. Prefer full-dim blocks
    # (contiguous HBM DMA, unmasked stores, gamma loaded once); only split dim
    # in >=512-lane chunks when even one sublane of rows would blow the budget.
    if dim % 128 == 0:
        if sublane * dim * itemsize <= target_block_bytes:
            tile_dim = dim
        else:
            tile_dim = max(512, (target_block_bytes // (sublane * itemsize)) // 512 * 512)
            tile_dim = min(tile_dim, dim)
        x2d = x.reshape(rows, dim)
        tile_rows = _pick_tile_rows(
            rows, tile_dim * itemsize, sublane=sublane,
            target_block_bytes=target_block_bytes, min_steps=min_steps)
        out2d = _run(x2d, gamma.reshape(1, dim), tile_rows, tile_dim,
                     vmem_limit_bytes=vmem_limit_bytes)
        return out2d.reshape(orig_shape)

    # --- Lane-dense repack: dim not a multiple of 128 but the flat length is a
    # multiple of lcm(dim, 128). Free reshape (no pad / no slice-back) into full
    # 128-lane rows so every store is unmasked; gamma tiles exactly.
    lane_width = (dim * 128) // math.gcd(dim, 128)  # lcm(dim, 128)
    if 0 < total and total % lane_width == 0 and lane_width <= max_lane_width:
        dense_rows = total // lane_width
        xd = x.reshape(dense_rows, lane_width)
        gamma_row = jnp.tile(gamma, lane_width // dim).reshape(1, lane_width)
        tile_rows = _pick_tile_rows(
            dense_rows, lane_width * itemsize, sublane=sublane,
            target_block_bytes=target_block_bytes, min_steps=min_steps)
        outd = _run(xd, gamma_row, tile_rows, lane_width,
                    vmem_limit_bytes=vmem_limit_bytes)
        return outd.reshape(orig_shape)

    # --- Fallback: awkward shapes (flat length not a multiple of lcm(dim,128),
    # or repacked rows too wide). Full-dim blocks are legal (last block dim
    # equals the array dim); no host-side pad/slice passes, stores may be masked.
    x2d = x.reshape(rows, dim)
    tile_rows = _pick_tile_rows(
        rows, dim * itemsize, sublane=sublane,
        target_block_bytes=target_block_bytes, min_steps=min_steps)
    out2d = _run(x2d, gamma.reshape(1, dim), tile_rows, dim,
                 vmem_limit_bytes=vmem_limit_bytes)
    return out2d.reshape(orig_shape)


if __name__ == "__main__":
    init_values = 1e-05
    key = jax.random.PRNGKey(0)
    k1, k2, k3, kg = jax.random.split(key, 4)

    # Case 1: small, non-128-aligned feature dim (matches the module example):
    # exercises the lane-dense repacking path (flat length % 128 == 0, no pad).
    dim1 = 32
    gamma1 = init_values * jnp.ones((dim1,), dtype=jnp.float32)
    x1 = jax.random.normal(k1, (2, 8, dim1), dtype=jnp.float32)
    out1 = jax.block_until_ready(layer_scale(x1, gamma1))
    assert out1.shape == x1.shape and out1.dtype == x1.dtype
    assert jnp.allclose(out1, x1 * gamma1, atol=1e-6, rtol=1e-6)

    # Case 2: 128-aligned feature dim, ragged row count, non-constant gamma:
    # full-dim block path + masked ragged last row block (no host pad/slice).
    dim2 = 256
    gamma2 = (init_values * (1.0 + jax.random.normal(kg, (dim2,)))).astype(jnp.float32)
    x2 = jax.random.normal(k2, (3, 7, dim2), dtype=jnp.float32)
    out2 = jax.block_until_ready(layer_scale(x2, gamma2))
    assert out2.shape == x2.shape and out2.dtype == x2.dtype
    assert jnp.allclose(out2, x2 * gamma2, atol=1e-6, rtol=1e-6)

    # Case 3: awkward shape (flat length not a multiple of lcm(dim,128)):
    # fallback full-dim-block path.
    dim3 = 48
    gamma3 = init_values * jnp.ones((dim3,), dtype=jnp.float32)
    x3 = jax.random.normal(k3, (5, dim3), dtype=jnp.float32)
    out3 = jax.block_until_ready(layer_scale(x3, gamma3))
    assert out3.shape == x3.shape and out3.dtype == x3.dtype
    assert jnp.allclose(out3, x3 * gamma3, atol=1e-6, rtol=1e-6)

    print("KERNEL_OK")
</pallas_src>

<mosaic_0001>
module attributes {stable_mosaic.version = 11 : i64} {
  func.func @_layerscale_kernel(%arg0: i32, %arg1: i32, %arg2: memref<8x128xf32, #tpu.memory_space<vmem>>, %arg3: memref<1x128xf32, #tpu.memory_space<vmem>>, %arg4: memref<8x128xf32, #tpu.memory_space<vmem>>) attributes {dimension_semantics = [#tpu.dimension_semantics<parallel>, #tpu.dimension_semantics<parallel>], iteration_bounds = array<i64: 1, 1>, scalar_prefetch = 0 : i64, scratch_operands = 0 : i64, tpu.core_type = #tpu.core_type<tc>, window_params = [{transform_indices = @transform_0, window_bounds = array<i64: 8, 128>}, {transform_indices = @transform_1, window_bounds = array<i64: 1, 128>}, {transform_indices = @transform_2, window_bounds = array<i64: 8, 128>}]} {
    %c0 = arith.constant 0 : index
    %c0_0 = arith.constant 0 : index
    %0 = vector.load %arg2[%c0, %c0_0] : memref<8x128xf32, #tpu.memory_space<vmem>>, vector<8x128xf32>
    %c0_1 = arith.constant 0 : index
    %c0_2 = arith.constant 0 : index
    %1 = vector.load %arg3[%c0_1, %c0_2] : memref<1x128xf32, #tpu.memory_space<vmem>>, vector<1x128xf32>
    %2 = vector.broadcast %1 : vector<1x128xf32> to vector<8x128xf32>
    %3 = arith.mulf %0, %2 : vector<8x128xf32>
    %c0_3 = arith.constant 0 : index
    %c0_4 = arith.constant 0 : index
    %4 = vector.load %arg4[%c0_3, %c0_4] : memref<8x128xf32, #tpu.memory_space<vmem>>, vector<8x128xf32>
    tpu.vector_store %arg4[%c0_3, %c0_4], %3 {strides = array<i32>} : memref<8x128xf32, #tpu.memory_space<vmem>>, vector<8x128xf32>,
    return
  }
  func.func @transform_0(%arg0: i32, %arg1: i32) -> (i32, i32) {
    %c0_i32 = arith.constant 0 : i32
    return %arg1, %arg0 : i32, i32
  }
  func.func @transform_1(%arg0: i32, %arg1: i32) -> (i32, i32) {
    %c0_i32 = arith.constant 0 : i32
    %c0_i32_0 = arith.constant 0 : i32
    return %c0_i32, %arg0 : i32, i32
  }
  func.func @transform_2(%arg0: i32, %arg1: i32) -> (i32, i32) {
    %c0_i32 = arith.constant 0 : i32
    return %arg1, %arg0 : i32, i32
  }
}

</mosaic_0001>

<llo_original>
// kernel: tpu_custom_call.1
$region0: #{tpu_custom_call.1}
  #allocation0 [shape = 'u32[]', space=smem, size = 0x4, offset = 0x4, fixed_abs, tag = 'smem constant byte address 0x4 - core index']
  #allocation1 [shape = 'u32[144,128]{1,0:T(1,128)}', space=vmem, size = 0x12000, scoped, tag = 'internal scratch']
  %s0 = inlined_call_operand.hbm [shape: f32[4,128], index: 0, kind: input, shape index: {}]
  %s1 = inlined_call_operand.vmem [shape: f32[1,128], index: 1, kind: input, shape index: {}]
  %s2 = inlined_call_operand.hbm [shape: f32[4,128], index: 2, kind: output, shape index: {}]
  %s3 = sld [smem:[#allocation0]]
  $region22: #{tpu_custom_call.1} parent=0
    _
  %s5 = ssub.s32 1, %s3
  %s6 = scalar_select 0, %s5, %s3
  $region1: #{tpu_custom_call.1} parent=0
    #allocation2 [shape = 'u8[4096]{0}', space=vmem, size = 0x1000, scoped, tag = 'input window, operand 0, single buffered']
    #allocation3 [shape = 's32[1]{0}', space=sflag, size = 0x4, scoped, tag = 'scoped memory for tpu_custom_call.1']
    #allocation4 [shape = 's32[1]{0}', space=sflag, size = 0x4, scoped, tag = 'scoped memory for tpu_custom_call.1']
    #allocation5 [shape = 'u8[4096]{0}', space=vmem, size = 0x1000, scoped, tag = 'output window, operand 0, single buffered']
    %7 = vsyncpa [#allocation3], 0
    %8 = vsyncpa [#allocation4], 0
    // Predicated region
    $region2: #{tpu_custom_call.1} parent=1 // pred_check
      _
    $region3: #{tpu_custom_call.1} parent=1 // pred_check_branch
      %10 = sbr.rel (0) target = $region5
    $region4: #{tpu_custom_call.1} parent=1 // pred_region
      %s12 = ssub.s32 128, 64
      %13 = vsyncadd [#allocation3], %s12
      %s14 = sshll.u32 [#allocation2], 4
      %s15 = int_to_ptr.vmem [resolvable:$true] %s14
      %20 = dma.hbm_to_vmem [thread:$0]  %s0, 64, %s15, [#allocation3], 64, 64, 4
    $region5: #{tpu_custom_call.1} parent=1 // pred_fallthru
      _
    // Predicated region
    $region6: #{tpu_custom_call.1} parent=1 // pred_check
      _
    $region7: #{tpu_custom_call.1} parent=1 // pred_check_branch
      %22 = sbr.rel (0) target = $region9
    $region8: #{tpu_custom_call.1} parent=1 // pred_region
      _
    $region9: #{tpu_custom_call.1} parent=1 // pred_fallthru
      _
    // Predicated region
    $region10: #{tpu_custom_call.1} parent=1 // pred_check
      _
    $region11: #{tpu_custom_call.1} parent=1 // pred_check_branch
      %24 = sbr.rel (0) target = $region13
    $region12: #{tpu_custom_call.1} parent=1 // pred_region
      %25 = dma.done [#allocation3], 128
    $region13: #{tpu_custom_call.1} parent=1 // pred_fallthru
      _
    %v26 = vld [vmem:[#allocation2] sm:$0xff]
    %v27 = vld [vmem:[%s1] sm:$0x1]
    %v29 = vlaneseq
    %v30 = vshrl.u32 %v29, 7
    %v31 = vsub.s32 0, %v30
    %v32 = vrot.slane %v27, %v31
    %v34 = vmul.f32 %v26, %v32
    %35 = vst [vmem:[#allocation5] sm:$0xff] %v34
    // Predicated region
    $region14: #{tpu_custom_call.1} parent=1 // pred_check
      _
    $region15: #{tpu_custom_call.1} parent=1 // pred_check_branch
      %37 = sbr.rel (0) target = $region17
    $region16: #{tpu_custom_call.1} parent=1 // pred_region
      %s39 = ssub.s32 128, 64
      %40 = vsyncadd [#allocation4], %s39
      %s41 = sshll.u32 [#allocation5], 4
      %s42 = int_to_ptr.vmem [resolvable:$true] %s41
      %47 = dma.vmem_to_hbm [thread:$0]  %s42, 64, %s2, [#allocation4], 64, 64, 4
    $region17: #{tpu_custom_call.1} parent=1 // pred_fallthru
      _
    // Predicated region
    $region18: #{tpu_custom_call.1} parent=1 // pred_check
      _
    $region19: #{tpu_custom_call.1} parent=1 // pred_check_branch
      %49 = sbr.rel (0) target = $region21
    $region20: #{tpu_custom_call.1} parent=1 // pred_region
      %50 = dma.done [#allocation4], 128
    $region21: #{tpu_custom_call.1} parent=1 // pred_fallthru
      _
    %51 = vsyncpa [#allocation3], 1
    %52 = vsyncpa [#allocation4], 1

</llo_original>
